<compile_context>
chip_gen: v5e
topology: v5e:2x2
jax: 0.10.0
libtpu: 0.0.40
codegen_flags: <defaults>
</compile_context>

<pallas_src>
import functools

import jax
import jax.numpy as jnp
from jax.experimental import pallas as pl
from jax.experimental.pallas import tpu as pltpu


def _self_attn_kernel(n_kb, gamma_ref, x_ref, w_ref, b_ref, o_ref,
                      k_scr, q_scr, v_scr):
    j = pl.program_id(1)
    ck, n = k_scr.shape
    c = v_scr.shape[0]
    tj = o_ref.shape[2]          # query-tile width (multiple of 128, or == N)
    tk = n // n_kb               # key-block width (static)

    # --- Compute K / Q / V once per batch element; persists in scratch across j.
    # Correctness relies on the j axis running sequentially 0..n_j-1 per batch
    # element ("arbitrary" dimension semantics) — do not flip it to "parallel".
    @pl.when(j == 0)
    def _():
        x_bf = x_ref[0].astype(jnp.bfloat16)                               # (C, N)
        # One fused projection matmul (bf16 operands, f32 accumulation) + fused bias.
        # TODO(synk): for v7x / very large N, compute this projection in N-column
        # chunks written straight into the scratch buffers (avoids the (Cp, N) f32
        # temporary) and tile x for the residual read via pl.ANY + manual DMA.
        proj = jnp.dot(w_ref[...], x_bf,
                       preferred_element_type=jnp.float32) + b_ref[...]    # (2Ck+C, N)
        k_scr[...] = proj[:ck].astype(jnp.bfloat16)                        # (Ck, N) key
        q_scr[...] = proj[ck:2 * ck].astype(jnp.bfloat16)                  # (Ck, N) query
        v_scr[...] = proj[2 * ck:].astype(jnp.bfloat16)                    # (C, N)  value

    # --- Per query tile ---
    start = pl.multiple_of(j * tj, tj)
    q_blk = q_scr[:, pl.ds(start, tj)]                                     # (Ck, TJ) bf16

    # logits[i, jj] = sum_c key[c, i] * query[c, jj]: contract axis 0 of both
    # operands — no physical transpose anywhere.
    contract0 = (((0,), (0,)), ((), ()))

    if n_kb == 1:
        # Flat path: whole key axis at once (small / medium N).
        s = jax.lax.dot_general(k_scr[...], q_blk, contract0,
                                preferred_element_type=jnp.float32)        # (N, TJ)
        m = jnp.max(s, axis=0, keepdims=True)                              # f32 softmax
        e = jnp.exp(s - m)
        l = jnp.sum(e, axis=0, keepdims=True)                              # (1, TJ)
        acc = jnp.dot(v_scr[...], e.astype(jnp.bfloat16),
                      preferred_element_type=jnp.float32)                  # (C, TJ)
    else:
        # Key-blocked online softmax: only a (TK, TJ) logits tile is ever live.
        def body(kb, carry):
            m, l, acc = carry
            ks = pl.multiple_of(kb * tk, tk)
            k_blk = k_scr[:, pl.ds(ks, tk)]                                # (Ck, TK)
            v_blk = v_scr[:, pl.ds(ks, tk)]                                # (C, TK)
            s = jax.lax.dot_general(k_blk, q_blk, contract0,
                                    preferred_element_type=jnp.float32)    # (TK, TJ)
            m_new = jnp.maximum(m, jnp.max(s, axis=0, keepdims=True))
            alpha = jnp.exp(m - m_new)
            e = jnp.exp(s - m_new)
            l_new = alpha * l + jnp.sum(e, axis=0, keepdims=True)
            acc_new = alpha * acc + jnp.dot(v_blk, e.astype(jnp.bfloat16),
                                            preferred_element_type=jnp.float32)
            return m_new, l_new, acc_new

        m0 = jnp.full((1, tj), -jnp.inf, jnp.float32)
        l0 = jnp.zeros((1, tj), jnp.float32)
        acc0 = jnp.zeros((c, tj), jnp.float32)
        _, l, acc = jax.lax.fori_loop(0, n_kb, body, (m0, l0, acc0),
                                      unroll=n_kb <= 4)

    # Deferred normalization: scale the (C, TJ) context instead of the (N, TJ)
    # attention weights; gamma folds into the same (1, TJ) scale. Reciprocal on
    # the EUP slot (~free).
    scale = gamma_ref[0, 0] * pl.reciprocal(l, approx=True)                # (1, TJ)
    x_blk = x_ref[0, :, pl.ds(start, tj)]                                  # (C, TJ) f32
    o_ref[0] = x_blk + acc * scale                                         # lane-dense store


def _vmem_limit_bytes(C, Ck, Cp, N, tj, tk):
    est = (
        2 * C * N * 4            # resident x block (double-buffered)
        + 2 * Cp * C * 2         # fused bf16 weight
        + 2 * Cp * 4             # fused bias
        + 2 * C * tj * 4         # output tile
        + 2 * Ck * N * 2         # key + query scratch (bf16)
        + C * N * 2              # value scratch (bf16)
        + Cp * N * 4             # (Cp, N) projection temp at j == 0
        + 4 * tk * tj * 4        # logits / exp temps
        + 3 * C * tj * 4         # context accumulator + scaled output temps
    )
    # Keep within physical VMEM on all chips (v7x per-TC VMEM is 64 MiB).
    return min(64 * 1024 * 1024, max(32 * 1024 * 1024, int(1.5 * est)))


@functools.partial(jax.jit, static_argnames=("tj", "tk"))
def self_attention_pallas(x_nchw, params, *, tj=None, tk=None):
    """x_nchw: (B, C, H, W) float32. Returns (B, C, H, W) float32."""
    B, C, H, W = x_nchw.shape
    N = H * W
    Ck = params["wk"].shape[0]
    Cp = 2 * Ck + C

    # Query-tile width: lane-dense multiple of 128 whenever possible.
    if tj is None:
        tj = next((t for t in (512, 256, 128) if N % t == 0), N)
    assert N % tj == 0, (N, tj)
    # Key-block width for the online softmax (n_kb == 1 -> flat path).
    if tk is None:
        tk = next((t for t in (1024, 512, 256, 128) if N % t == 0), N)
    assert N % tk == 0, (N, tk)
    n_j = N // tj
    n_kb = N // tk

    x_flat = x_nchw.reshape(B, C, N).astype(jnp.float32)

    # Fused projection weight/bias: one wide MXU matmul instead of three skinny ones.
    w_fused = jnp.concatenate(
        [params["wk"], params["wq"], params["wv"]], axis=0).astype(jnp.bfloat16)  # (Cp, C)
    b_fused = jnp.concatenate(
        [params["bk"], params["bq"], params["bv"]], axis=0
    ).reshape(Cp, 1).astype(jnp.float32)
    gamma = params["gamma"].reshape(1, 1).astype(jnp.float32)

    cost = pl.CostEstimate(
        flops=2 * B * (Cp * C * N + N * N * Ck + N * N * C),
        transcendentals=B * N * N,
        bytes_accessed=4 * B * C * N * 2 + 2 * Cp * C + 4 * Cp + 4,
    )

    out_flat = pl.pallas_call(
        functools.partial(_self_attn_kernel, n_kb),
        out_shape=jax.ShapeDtypeStruct((B, C, N), jnp.float32),
        grid=(B, n_j),
        in_specs=[
            pl.BlockSpec(memory_space=pltpu.MemorySpace.SMEM),    # gamma (1, 1) scalar
            pl.BlockSpec((1, C, N), lambda b, j: (b, 0, 0)),      # x: resident across j
            pl.BlockSpec((Cp, C), lambda b, j: (0, 0)),           # fused weight (bf16)
            pl.BlockSpec((Cp, 1), lambda b, j: (0, 0)),           # fused bias (f32)
        ],
        out_specs=pl.BlockSpec((1, C, tj), lambda b, j: (b, 0, j)),
        scratch_shapes=[
            pltpu.VMEM((Ck, N), jnp.bfloat16),   # key   (bf16 MXU operand, no transpose)
            pltpu.VMEM((Ck, N), jnp.bfloat16),   # query (bf16 MXU operand)
            pltpu.VMEM((C, N), jnp.bfloat16),    # value (bf16 MXU operand)
        ],
        compiler_params=pltpu.CompilerParams(
            dimension_semantics=("parallel", "arbitrary"),
            vmem_limit_bytes=_vmem_limit_bytes(C, Ck, Cp, N, tj, tk)),
        cost_estimate=cost,
    )(gamma, x_flat, w_fused, b_fused)

    return out_flat.reshape(B, C, H, W)


def self_attention_ref(x_nchw, params):
    """Pure-JAX f32 reference mirroring the PyTorch forward."""
    B, C, H, W = x_nchw.shape
    N = H * W
    x = x_nchw.reshape(B, C, N)
    key = jnp.einsum("oc,bcn->bon", params["wk"], x) + params["bk"][None, :, None]
    query = jnp.einsum("oc,bcn->bon", params["wq"], x) + params["bq"][None, :, None]
    value = jnp.einsum("oc,bcn->bon", params["wv"], x) + params["bv"][None, :, None]
    logits = jnp.einsum("bci,bcj->bij", key, query)
    attn = jax.nn.softmax(logits, axis=1)          # torch dim=1 (key index)
    context = jnp.einsum("bci,bij->bcj", value, attn)
    out = x + params["gamma"] * context
    return out.reshape(B, C, H, W)


def _spectral_normalize(w_2d):
    # PyTorch spectral_norm divides the weight by its largest singular value
    # (power iteration estimate); here we use the exact sigma.
    sigma = jnp.linalg.svd(w_2d, compute_uv=False)[0]
    return w_2d / sigma


def make_params(key, in_channels):
    C = in_channels
    Ck = C // 8
    k1, k2, k3, k4, k5, k6 = jax.random.split(key, 6)
    # Conv2d(in, out, 1) weight shape (out, in, 1, 1) -> (out, in)
    wk = _spectral_normalize(jax.random.normal(k1, (Ck, C), jnp.float32) * 0.1)
    wq = _spectral_normalize(jax.random.normal(k2, (Ck, C), jnp.float32) * 0.1)
    wv = _spectral_normalize(jax.random.normal(k3, (C, C), jnp.float32) * 0.1)
    bk = jax.random.normal(k4, (Ck,), jnp.float32) * 0.01
    bq = jax.random.normal(k5, (Ck,), jnp.float32) * 0.01
    bv = jax.random.normal(k6, (C,), jnp.float32) * 0.01
    gamma = jnp.array(0.0, jnp.float32)            # faithful init: gamma = 0
    return dict(wk=wk, wq=wq, wv=wv, bk=bk, bq=bq, bv=bv, gamma=gamma)


if __name__ == "__main__":
    B, C, H, W = 2, 32, 16, 16                     # C // 8 = 4 key/query channels, N = 256
    root = jax.random.PRNGKey(0)
    kx, kp = jax.random.split(root)
    x = jax.random.normal(kx, (B, C, H, W), jnp.float32)
    params = make_params(kp, C)

    # Faithful run (gamma = 0, as in the module's __init__): output must equal x.
    out = jax.block_until_ready(self_attention_pallas(x, params, tj=128))
    ref = self_attention_ref(x, params)
    assert jnp.allclose(out, ref, atol=2e-2, rtol=2e-2), float(jnp.max(jnp.abs(out - ref)))

    # Exercise the attention path with nonzero gamma: flat-softmax path (tk = N).
    params_nz = dict(params, gamma=jnp.array(0.5, jnp.float32))
    ref_nz = self_attention_ref(x, params_nz)
    out_nz = jax.block_until_ready(self_attention_pallas(x, params_nz, tj=128))
    assert jnp.allclose(out_nz, ref_nz, atol=2e-2, rtol=2e-2), float(
        jnp.max(jnp.abs(out_nz - ref_nz)))

    # Also exercise the key-blocked online-softmax path (tk=128 -> 2 key blocks).
    out_nz_blk = jax.block_until_ready(
        self_attention_pallas(x, params_nz, tj=128, tk=128))
    assert jnp.allclose(out_nz_blk, ref_nz, atol=2e-2, rtol=2e-2), float(
        jnp.max(jnp.abs(out_nz_blk - ref_nz)))

    print("KERNEL_OK")
</pallas_src>

<mosaic_0001>
module attributes {stable_mosaic.version = 11 : i64} {
  func.func @_self_attn_kernel(%arg0: i32, %arg1: i32, %arg2: memref<1x1xf32, #tpu.memory_space<smem>>, %arg3: memref<1x32x256xf32, #tpu.memory_space<vmem>>, %arg4: memref<40x32xbf16, #tpu.memory_space<vmem>>, %arg5: memref<40x1xf32, #tpu.memory_space<vmem>>, %arg6: memref<1x32x128xf32, #tpu.memory_space<vmem>>, %arg7: memref<4x256xbf16, #tpu.memory_space<vmem>>, %arg8: memref<4x256xbf16, #tpu.memory_space<vmem>>, %arg9: memref<32x256xbf16, #tpu.memory_space<vmem>>) attributes {dimension_semantics = [#tpu.dimension_semantics<parallel>, #tpu.dimension_semantics<arbitrary>], iteration_bounds = array<i64: 2, 2>, scalar_prefetch = 0 : i64, scratch_operands = 3 : i64, tpu.core_type = #tpu.core_type<tc>, window_params = [{transform_indices = @transform_0, window_bounds = array<i64: 1, 1>}, {transform_indices = @transform_1, window_bounds = array<i64: 1, 32, 256>}, {pipeline_mode = #tpu.pipeline_mode<synchronous>, transform_indices = @transform_2, window_bounds = array<i64: 40, 32>}, {pipeline_mode = #tpu.pipeline_mode<synchronous>, transform_indices = @transform_3, window_bounds = array<i64: 40, 1>}, {transform_indices = @transform_4, window_bounds = array<i64: 1, 32, 128>}]} {
    %c0_i32 = arith.constant 0 : i32
    %0 = arith.cmpi eq, %arg1, %c0_i32 : i32
    %1 = arith.extui %0 : i1 to i32
    %c0_i32_0 = arith.constant 0 : i32
    %2 = arith.cmpi ne, %1, %c0_i32_0 : i32
    scf.if %2 {
      %c0_15 = arith.constant 0 : index
      %c0_16 = arith.constant 0 : index
      %c0_17 = arith.constant 0 : index
      %32 = vector.load %arg3[%c0_15, %c0_16, %c0_17] : memref<1x32x256xf32, #tpu.memory_space<vmem>>, vector<1x32x256xf32>
      %33 = vector.shape_cast %32 : vector<1x32x256xf32> to vector<32x256xf32>
      %34 = arith.truncf %33 : vector<32x256xf32> to vector<32x256xbf16>
      %c0_18 = arith.constant 0 : index
      %c0_19 = arith.constant 0 : index
      %35 = vector.load %arg4[%c0_18, %c0_19] : memref<40x32xbf16, #tpu.memory_space<vmem>>, vector<40x32xbf16>
      %cst_20 = arith.constant dense<0.000000e+00> : vector<40x256xf32>
      %36 = tpu.matmul %35, %34, %cst_20 {dimension_numbers = #tpu.dot_dimension_numbers<[1], [0], [0], [1], [0, 0, 1, 1], [], []>} : vector<40x32xbf16>, vector<32x256xbf16>, vector<40x256xf32> -> vector<40x256xf32>
      %c0_21 = arith.constant 0 : index
      %c0_22 = arith.constant 0 : index
      %37 = vector.load %arg5[%c0_21, %c0_22] : memref<40x1xf32, #tpu.memory_space<vmem>>, vector<40x1xf32>
      %38 = vector.broadcast %37 : vector<40x1xf32> to vector<40x256xf32>
      %39 = arith.addf %36, %38 : vector<40x256xf32>
      %40 = vector.extract_strided_slice %39 {offsets = [0, 0], sizes = [4, 256], strides = [1, 1]} : vector<40x256xf32> to vector<4x256xf32>
      %41 = arith.truncf %40 : vector<4x256xf32> to vector<4x256xbf16>
      %c0_23 = arith.constant 0 : index
      %c0_24 = arith.constant 0 : index
      %42 = vector.load %arg7[%c0_23, %c0_24] : memref<4x256xbf16, #tpu.memory_space<vmem>>, vector<4x256xbf16>
      tpu.vector_store %arg7[%c0_23, %c0_24], %41 {strides = array<i32>} : memref<4x256xbf16, #tpu.memory_space<vmem>>, vector<4x256xbf16>,
      %43 = vector.extract_strided_slice %39 {offsets = [4, 0], sizes = [4, 256], strides = [1, 1]} : vector<40x256xf32> to vector<4x256xf32>
      %44 = arith.truncf %43 : vector<4x256xf32> to vector<4x256xbf16>
      %c0_25 = arith.constant 0 : index
      %c0_26 = arith.constant 0 : index
      %45 = vector.load %arg8[%c0_25, %c0_26] : memref<4x256xbf16, #tpu.memory_space<vmem>>, vector<4x256xbf16>
      tpu.vector_store %arg8[%c0_25, %c0_26], %44 {strides = array<i32>} : memref<4x256xbf16, #tpu.memory_space<vmem>>, vector<4x256xbf16>,
      %46 = vector.extract_strided_slice %39 {offsets = [8, 0], sizes = [32, 256], strides = [1, 1]} : vector<40x256xf32> to vector<32x256xf32>
      %47 = arith.truncf %46 : vector<32x256xf32> to vector<32x256xbf16>
      %c0_27 = arith.constant 0 : index
      %c0_28 = arith.constant 0 : index
      %48 = vector.load %arg9[%c0_27, %c0_28] : memref<32x256xbf16, #tpu.memory_space<vmem>>, vector<32x256xbf16>
      tpu.vector_store %arg9[%c0_27, %c0_28], %47 {strides = array<i32>} : memref<32x256xbf16, #tpu.memory_space<vmem>>, vector<32x256xbf16>,
    } else {
    }
    %c128_i32 = arith.constant 128 : i32
    %3 = arith.muli %arg1, %c128_i32 : i32
    %4 = tpu.assume_multiple %3, 128 : i32
    %c0 = arith.constant 0 : index
    %5 = arith.index_cast %4 : i32 to index
    %6 = vector.load %arg8[%c0, %5] : memref<4x256xbf16, #tpu.memory_space<vmem>>, vector<4x128xbf16>
    %c0_1 = arith.constant 0 : index
    %c0_2 = arith.constant 0 : index
    %7 = vector.load %arg7[%c0_1, %c0_2] : memref<4x256xbf16, #tpu.memory_space<vmem>>, vector<4x256xbf16>
    %cst = arith.constant dense<0.000000e+00> : vector<256x128xf32>
    %8 = tpu.matmul %7, %6, %cst {dimension_numbers = #tpu.dot_dimension_numbers<[0], [0], [1], [1], [0, 1, 1, 1], [], []>} : vector<4x256xbf16>, vector<4x128xbf16>, vector<256x128xf32> -> vector<256x128xf32>
    %cst_3 = arith.constant dense<0xFF800000> : vector<128xf32>
    %9 = vector.multi_reduction <maximumf>, %8, %cst_3 [0] : vector<256x128xf32> to vector<128xf32>
    %10 = vector.shape_cast %9 : vector<128xf32> to vector<1x128xf32>
    %11 = vector.broadcast %10 : vector<1x128xf32> to vector<256x128xf32>
    %12 = arith.subf %8, %11 : vector<256x128xf32>
    %13 = math.exp %12 : vector<256x128xf32>
    %cst_4 = arith.constant dense<0.000000e+00> : vector<128xf32>
    %14 = vector.multi_reduction <add>, %13, %cst_4 [0] : vector<256x128xf32> to vector<128xf32>
    %15 = vector.shape_cast %14 : vector<128xf32> to vector<1x128xf32>
    %c0_5 = arith.constant 0 : index
    %c0_6 = arith.constant 0 : index
    %16 = vector.load %arg9[%c0_5, %c0_6] : memref<32x256xbf16, #tpu.memory_space<vmem>>, vector<32x256xbf16>
    %17 = arith.truncf %13 : vector<256x128xf32> to vector<256x128xbf16>
    %cst_7 = arith.constant dense<0.000000e+00> : vector<32x128xf32>
    %18 = tpu.matmul %16, %17, %cst_7 {dimension_numbers = #tpu.dot_dimension_numbers<[1], [0], [0], [1], [0, 0, 1, 1], [], []>} : vector<32x256xbf16>, vector<256x128xbf16>, vector<32x128xf32> -> vector<32x128xf32>
    %c0_8 = arith.constant 0 : index
    %c0_9 = arith.constant 0 : index
    %19 = memref.load %arg2[%c0_8, %c0_9] : memref<1x1xf32, #tpu.memory_space<smem>>
    %20 = tpu.reciprocal %15 {approx = true} : vector<1x128xf32> -> vector<1x128xf32>
    %21 = vector.broadcast %19 : f32 to vector<1x128xf32>
    %22 = arith.mulf %21, %20 : vector<1x128xf32>
    %c0_10 = arith.constant 0 : index
    %c0_11 = arith.constant 0 : index
    %23 = arith.index_cast %4 : i32 to index
    %24 = vector.load %arg3[%c0_10, %c0_11, %23] : memref<1x32x256xf32, #tpu.memory_space<vmem>>, vector<1x32x128xf32>
    %25 = vector.shape_cast %24 : vector<1x32x128xf32> to vector<32x128xf32>
    %26 = vector.broadcast %22 : vector<1x128xf32> to vector<32x128xf32>
    %27 = arith.mulf %18, %26 : vector<32x128xf32>
    %28 = arith.addf %25, %27 : vector<32x128xf32>
    %c0_12 = arith.constant 0 : index
    %c0_13 = arith.constant 0 : index
    %c0_14 = arith.constant 0 : index
    %29 = vector.load %arg6[%c0_12, %c0_13, %c0_14] : memref<1x32x128xf32, #tpu.memory_space<vmem>>, vector<1x32x128xf32>
    %30 = vector.shape_cast %29 : vector<1x32x128xf32> to vector<32x128xf32>
    %31 = vector.shape_cast %28 : vector<32x128xf32> to vector<1x32x128xf32>
    tpu.vector_store %arg6[%c0_12, %c0_13, %c0_14], %31 {strides = array<i32>} : memref<1x32x128xf32, #tpu.memory_space<vmem>>, vector<1x32x128xf32>,
    return
  }
  func.func @transform_0(%arg0: i32, %arg1: i32) -> (i32, i32) {
    %c0_i32 = arith.constant 0 : i32
    %c0_i32_0 = arith.constant 0 : i32
    %c0_i32_1 = arith.constant 0 : i32
    return %c0_i32, %c0_i32_0 : i32, i32
  }
  func.func @transform_1(%arg0: i32, %arg1: i32) -> (i32, i32, i32) {
    %c0_i32 = arith.constant 0 : i32
    %c0_i32_0 = arith.constant 0 : i32
    %c0_i32_1 = arith.constant 0 : i32
    return %arg0, %c0_i32, %c0_i32_0 : i32, i32, i32
  }
  func.func @transform_2(%arg0: i32, %arg1: i32) -> (i32, i32) {
    %c0_i32 = arith.constant 0 : i32
    %c0_i32_0 = arith.constant 0 : i32
    %c0_i32_1 = arith.constant 0 : i32
    return %c0_i32, %c0_i32_0 : i32, i32
  }
  func.func @transform_3(%arg0: i32, %arg1: i32) -> (i32, i32) {
    %c0_i32 = arith.constant 0 : i32
    %c0_i32_0 = arith.constant 0 : i32
    %c0_i32_1 = arith.constant 0 : i32
    return %c0_i32, %c0_i32_0 : i32, i32
  }
  func.func @transform_4(%arg0: i32, %arg1: i32) -> (i32, i32, i32) {
    %c0_i32 = arith.constant 0 : i32
    %c0_i32_0 = arith.constant 0 : i32
    return %arg0, %c0_i32, %arg1 : i32, i32, i32
  }
}

</mosaic_0001>

<llo_original>
// kernel: self_attention_pallas.1
$region0: #{self_attention_pallas.1}
  #allocation0 [shape = 'u32[]', space=smem, size = 0x4, offset = 0x4, fixed_abs, tag = 'smem constant byte address 0x4 - core index']
  #allocation1 [shape = 'u32[72,128]{1,0:T(1,128)}', space=vmem, size = 0x9000, scoped, tag = 'internal scratch']
  #allocation2 [shape = 'bf16[4,256]{1,0:T(4,128)(2,1)}', space=vmem, size = 0x800, scoped, tag = 'scratch operand']
  #allocation3 [shape = 'bf16[4,256]{1,0:T(4,128)(2,1)}', space=vmem, size = 0x800, scoped, tag = 'scratch operand']
  #allocation4 [shape = 'bf16[32,256]{1,0:T(8,128)(2,1)}', space=vmem, size = 0x4000, scoped, tag = 'scratch operand']
  #allocation5 [shape = 'f32[1,1]{1,0:T(1,128)S(6)}', space=smem, size = 0x200, scoped, tag = 'scoped memory for self_attention_pallas.1']
  %s0 = inlined_call_operand.<no memory space> [shape: f32[1,1], index: 0, kind: input, shape index: {}]
  %s1 = inlined_call_operand.vmem [shape: f32[2,32,256], index: 1, kind: input, shape index: {}]
  %s2 = inlined_call_operand.vmem [shape: bf16[40,32], index: 2, kind: input, shape index: {}]
  %s3 = inlined_call_operand.vmem [shape: f32[40,1], index: 3, kind: input, shape index: {}]
  %s4 = inlined_call_operand.vmem [shape: f32[2,32,256], index: 4, kind: output, shape index: {}]
  %s5 = sld [smem:[#allocation0]]
  $region87: #{self_attention_pallas.1} parent=0
    _
  %s7 = ssub.s32 1, %s5
  %s8 = scalar_select 0, %s7, %s5
  %9 = sst [smem:[#allocation5]] %s0
  $region1: #{self_attention_pallas.1} parent=0
    #allocation6 [shape = 'u8[32768]{0}', space=vmem, size = 0x8000, scoped, tag = 'output window, operand 0']
    loop: start=0, step=1, limit=6
    $region2: #{self_attention_pallas.1} parent=1 // loop_pre_header
      _
    $region3: #{self_attention_pallas.1} parent=1 // loop_header
      %s11 = sphi 0, %s15
      %p12 = scmp.ge.s32.totalorder %s11, 6
      %s18 = sphi 0, %s30
      %s19 = sphi 0, %s26
      %s20 = sphi 0, %s18
      %s21 = sphi 0, %s19
      %s22 = sphi 0, %s20
      %s23 = sphi 0, %s21
      %s31 = sphi 0, %s31
      %s33 = sphi 0, %s31
      %s34 = sphi 0, %s33
      %s48 = sphi 0, %s34
      %s54 = sphi 0, %s56
      %s57 = sphi 0, %s54
      %s58 = sphi 0, %s57
      %s74 = sphi 0, %s58
      %s78 = sphi 0, %s78
      %s80 = sphi 0, %s78
      %s81 = sphi 0, %s80
      %s95 = sphi 0, %s81
      %s99 = sphi 0, %s99
      %s101 = sphi 0, %s99
      %s102 = sphi 0, %s101
      %s116 = sphi 0, %s102
      %s124 = sphi 0, %s126
      %s127 = sphi 0, %s124
      %s128 = sphi 0, %s127
      %s144 = sphi 0, %s128
    $region4: #{self_attention_pallas.1} parent=1 // loop_header_branch
      %14 = sbr.rel (%p12) target = $region8
    $region5: #{self_attention_pallas.1} parent=1 // loop_body
      %s16 = ssub.s32 %s11, 1
      %s17 = ssub.s32 %s11, 2
      %s24 = sadd.s32 1, %s19
      %p25 = scmp.ge.s32.totalorder %s24, 2
      %s26 = scalar_select %p25, 0, %s24
      %s27 = sadd.s32 1, %s18
      %s28 = scalar_select %p25, %s27, %s18
      %p29 = scmp.ge.s32.totalorder %s28, 2
      %s30 = scalar_select %p29, 0, %s28
      %s32 = sadd.s32 %s31, 1
      %p35 = scmp.eq.s32.totalorder %s11, 3
      %p36 = scmp.ne.s32.totalorder %s31, %s33
      %p37 = scmp.eq.s32.totalorder %s11, 0
      %p38 = por %p36, %p37
      %p39 = scmp.ne.s32.totalorder %s31, %s33
      %p40 = scmp.eq.s32.totalorder %s16, 3
      %p41 = por %p39, %p40
      %p42 = scmp.ne.s32.totalorder %s33, %s34
      %p43 = scmp.eq.s32.totalorder %s16, 0
      %p44 = por %p42, %p43
      %p45 = scmp.ne.s32.totalorder %s33, %s34
      %p46 = scmp.eq.s32.totalorder %s17, 3
      %p47 = por %p45, %p46
      %p49 = scmp.ne.s32.totalorder %s34, %s48
      %p50 = scmp.eq.s32.totalorder %s17, 0
      %p51 = por %p49, %p50
      %s52 = ssub.s32 %s18, %s30
      %p53 = scmp.eq.s32.totalorder %s52, 0
      %s55 = sadd.s32 %s54, 1
      %s56 = scalar_select %p53, %s54, %s55
      %p59 = pneg %p53
      %p60 = scmp.eq.s32.totalorder %s11, 3
      %p61 = por %p59, %p60
      %p62 = scmp.ne.s32.totalorder %s54, %s57
      %p63 = scmp.eq.s32.totalorder %s11, 0
      %p64 = por %p62, %p63
      %p65 = scmp.ne.s32.totalorder %s54, %s57
      %p66 = scmp.eq.s32.totalorder %s16, 3
      %p67 = por %p65, %p66
      %p68 = scmp.ne.s32.totalorder %s57, %s58
      %p69 = scmp.eq.s32.totalorder %s16, 0
      %p70 = por %p68, %p69
      %p71 = scmp.ne.s32.totalorder %s57, %s58
      %p72 = scmp.eq.s32.totalorder %s17, 3
      %p73 = por %p71, %p72
      %p75 = scmp.ne.s32.totalorder %s58, %s74
      %p76 = scmp.eq.s32.totalorder %s17, 0
      %p77 = por %p75, %p76
      %s79 = sadd.s32 %s78, 1
      %p82 = scmp.eq.s32.totalorder %s11, 3
      %p83 = scmp.ne.s32.totalorder %s78, %s80
      %p84 = scmp.eq.s32.totalorder %s11, 0
      %p85 = por %p83, %p84
      %p86 = scmp.ne.s32.totalorder %s78, %s80
      %p87 = scmp.eq.s32.totalorder %s16, 3
      %p88 = por %p86, %p87
      %p89 = scmp.ne.s32.totalorder %s80, %s81
      %p90 = scmp.eq.s32.totalorder %s16, 0
      %p91 = por %p89, %p90
      %p92 = scmp.ne.s32.totalorder %s80, %s81
      %p93 = scmp.eq.s32.totalorder %s17, 3
      %p94 = por %p92, %p93
      %p96 = scmp.ne.s32.totalorder %s81, %s95
      %p97 = scmp.eq.s32.totalorder %s17, 0
      %p98 = por %p96, %p97
      %s100 = sadd.s32 %s99, 1
      %p103 = scmp.eq.s32.totalorder %s11, 3
      %p104 = scmp.ne.s32.totalorder %s99, %s101
      %p105 = scmp.eq.s32.totalorder %s11, 0
      %p106 = por %p104, %p105
      %p107 = scmp.ne.s32.totalorder %s99, %s101
      %p108 = scmp.eq.s32.totalorder %s16, 3
      %p109 = por %p107, %p108
      %p110 = scmp.ne.s32.totalorder %s101, %s102
      %p111 = scmp.eq.s32.totalorder %s16, 0
      %p112 = por %p110, %p111
      %p113 = scmp.ne.s32.totalorder %s101, %s102
      %p114 = scmp.eq.s32.totalorder %s17, 3
      %p115 = por %p113, %p114
      %p117 = scmp.ne.s32.totalorder %s102, %s116
      %p118 = scmp.eq.s32.totalorder %s17, 0
      %p119 = por %p117, %p118
      %s120 = ssub.s32 %s18, %s30
      %s121 = ssub.s32 %s19, %s26
      %s122 = sor.u32 %s120, %s121
      %p123 = scmp.eq.s32.totalorder %s122, 0
      %s125 = sadd.s32 %s124, 1
      %s126 = scalar_select %p123, %s124, %s125
      %p129 = pneg %p123
      %p130 = scmp.eq.s32.totalorder %s11, 3
      %p131 = por %p129, %p130
      %p132 = scmp.ne.s32.totalorder %s124, %s127
      %p133 = scmp.eq.s32.totalorder %s11, 0
      %p134 = por %p132, %p133
      %p135 = scmp.ne.s32.totalorder %s124, %s127
      %p136 = scmp.eq.s32.totalorder %s16, 3
      %p137 = por %p135, %p136
      %p138 = scmp.ne.s32.totalorder %s127, %s128
      %p139 = scmp.eq.s32.totalorder %s16, 0
      %p140 = por %p138, %p139
      %p141 = scmp.ne.s32.totalorder %s127, %s128
      %p142 = scmp.eq.s32.totalorder %s17, 3
      %p143 = por %p141, %p142
      %p145 = scmp.ne.s32.totalorder %s128, %s144
      %p146 = scmp.eq.s32.totalorder %s17, 0
      %p147 = por %p145, %p146
      %p148 = scmp.le.s32.totalorder 1, %s11
      %p149 = scmp.lt.s32.totalorder %s11, 5
      %p150 = pnand %p148, %p149
      %p151 = pneg %p150
      // Predicated region
      $region9: #{self_attention_pallas.1} parent=5 // pred_check
        _
      $region10: #{self_attention_pallas.1} parent=5 // pred_check_branch
        %153 = sbr.rel (%p150) target = $region12
      $region11: #{self_attention_pallas.1} parent=5 // pred_region
        %s154 = ssub.s32 %s11, 1
        // Predicated region
        $region13: #{self_attention_pallas.1} parent=11 // pred_check
          %p155 = pneg %p44
        $region14: #{self_attention_pallas.1} parent=11 // pred_check_branch
          %157 = sbr.rel (%p155) target = $region16
        $region15: #{self_attention_pallas.1} parent=11 // pred_region
          _
        $region16: #{self_attention_pallas.1} parent=11 // pred_fallthru
          _
        // Predicated region
        $region17: #{self_attention_pallas.1} parent=11 // pred_check
          %p158 = pneg %p91
        $region18: #{self_attention_pallas.1} parent=11 // pred_check_branch
          %160 = sbr.rel (%p158) target = $region20
        $region19: #{self_attention_pallas.1} parent=11 // pred_region
          _
        $region20: #{self_attention_pallas.1} parent=11 // pred_fallthru
          _
        // Predicated region
        $region21: #{self_attention_pallas.1} parent=11 // pred_check
          %p161 = pneg %p112
        $region22: #{self_attention_pallas.1} parent=11 // pred_check_branch
          %163 = sbr.rel (%p161) target = $region24
        $region23: #{self_attention_pallas.1} parent=11 // pred_region
          _
        $region24: #{self_attention_pallas.1} parent=11 // pred_fallthru
          _
      $region12: #{self_attention_pallas.1} parent=5 // pred_fallthru
        _
      %p164 = scmp.lt.s32.totalorder %s11, 4
      // Predicated region
      $region25: #{self_attention_pallas.1} parent=5 // pred_check
        %p165 = pneg %p164
      $region26: #{self_attention_pallas.1} parent=5 // pred_check_branch
        %167 = sbr.rel (%p165) target = $region28
      $region27: #{self_attention_pallas.1} parent=5 // pred_region
        // Predicated region
        $region29: #{self_attention_pallas.1} parent=27 // pred_check
          %p168 = pneg %p64
        $region30: #{self_attention_pallas.1} parent=27 // pred_check_branch
          %170 = sbr.rel (%p168) target = $region32
        $region31: #{self_attention_pallas.1} parent=27 // pred_region
          %p171 = scmp.lt.s32.totalorder %s18, 1
          %s172 = scalar_select %p171, %s18, 1
          %s173 = smul.addr %s172, 8
          %s174 = smul.addr %s173, 8
          %s175 = scalar_lea.vmem %s1, %s174
        $region32: #{self_attention_pallas.1} parent=27 // pred_fallthru
          _
      $region28: #{self_attention_pallas.1} parent=5 // pred_fallthru
        _
      %p176 = scmp.le.s32.totalorder 1, %s11
      %p177 = scmp.lt.s32.totalorder %s11, 5
      %p178 = pnand %p176, %p177
      %p179 = pneg %p178
      // Predicated region
      $region33: #{self_attention_pallas.1} parent=5 // pred_check
        _
      $region34: #{self_attention_pallas.1} parent=5 // pred_check_branch
        %181 = sbr.rel (%p178) target = $region36
      $region35: #{self_attention_pallas.1} parent=5 // pred_region
        %s182 = ssub.s32 %s11, 1
        %p183 = pneg %p44
        %p184 = pneg %p41
        %p185 = scmp.lt.s32.totalorder %s20, 1
        %s186 = scalar_select %p185, %s20, 1
        %s187 = smul.addr %s186, 8
        %s188 = smul.addr %s187, 8
        %s189 = scalar_lea.vmem %s1, %s188
        %p190 = pneg %p70
        %p191 = pneg %p67
        %p192 = pneg %p91
        %p193 = pneg %p88
        %p194 = pneg %p112
        %p195 = pneg %p109
        %p196 = pneg %p140
        %p197 = pneg %p137
        %s198 = sand.u32 %s127, 1
        %s199 = sand.u32 %s127, 1
        %s200 = smul.addr %s199, 32
        %s201 = scalar_lea.vmem [#allocation6], %s200
        %p202 = scmp.lt.s32.totalorder %s20, 1
        %s203 = scalar_select %p202, %s20, 1
        %s204 = smul.addr %s203, 8
        %s205 = smul.addr %s204, 8
        %s206 = scalar_lea.vmem %s1, %s205
        %p208 = scmp.eq.s32.totalorder %s21, 0
        // Predicated region
        $region37: #{self_attention_pallas.1} parent=35 // pred_check
          %p209 = pneg %p208
        $region38: #{self_attention_pallas.1} parent=35 // pred_check_branch
          %211 = sbr.rel (%p209) target = $region40
        $region39: #{self_attention_pallas.1} parent=35 // pred_region
          %v212 = vld [vmem:[%s206] sm:$0xff]
          %v213 = vld [vmem:[%s206 + $0x8] sm:$0xff]
          %v214 = vld [vmem:[%s206 + $0x10] sm:$0xff]
          %v215 = vld [vmem:[%s206 + $0x18] sm:$0xff]
          %v216 = vld [vmem:[%s206 + $0x20] sm:$0xff]
          %v217 = vld [vmem:[%s206 + $0x28] sm:$0xff]
          %v218 = vld [vmem:[%s206 + $0x30] sm:$0xff]
          %v219 = vld [vmem:[%s206 + $0x38] sm:$0xff]
          %v220 = vpack.c.bf16 %v214, %v212
          %v221 = vpack.c.bf16 %v215, %v213
          %v222 = vpack.c.bf16 %v218, %v216
          %v223 = vpack.c.bf16 %v219, %v217
          %v224 = vld [vmem:[%s2] sm:$0xf]
          %v225 = vld [vmem:[%s2 + $0x4] sm:$0xf]
          %v226 = vld [vmem:[%s2 + $0x8] sm:$0xf]
          %v227 = vld [vmem:[%s2 + $0xc] sm:$0xf]
          %v228 = vld [vmem:[%s2 + $0x10] sm:$0xf]
          %v229 = vld [vmem:[%s3] sm:$0xff]
          %v230 = vld [vmem:[%s3 + $0x8] sm:$0xff]
          %v231 = vld [vmem:[%s3 + $0x10] sm:$0xff]
          %v232 = vld [vmem:[%s3 + $0x18] sm:$0xff]
          %v233 = vld [vmem:[%s3 + $0x20] sm:$0xff]
          %235 = vset.pattern.permute.xlu0 0
          %236 = vperm.xlu0 %235, %v229
          %v237 = vpop.permute.xlu0 %236
          %240 = vset.pattern.permute.xlu0 0
          %241 = vperm.xlu0 %240, %v230
          %v242 = vpop.permute.xlu0 %241
          %245 = vset.pattern.permute.xlu0 0
          %246 = vperm.xlu0 %245, %v231
          %v247 = vpop.permute.xlu0 %246
          %250 = vset.pattern.permute.xlu0 0
          %251 = vperm.xlu0 %250, %v232
          %v252 = vpop.permute.xlu0 %251
          %255 = vset.pattern.permute.xlu0 0
          %256 = vperm.xlu0 %255, %v233
          %v257 = vpop.permute.xlu0 %256
          %v264 = vunpack.c.l.b16 %v224
          %v265 = vunpack.c.l.b16 %v225
          %v266 = vunpack.c.l.b16 %v226
          %v267 = vunpack.c.l.b16 %v227
          %v268 = vunpack.c.l.b16 %v228
          %v269 = vpack.c.b16 %v265, %v264
          %v270 = vpack.c.b16 %v267, %v266
          %v271 = vpack.c.b16 %v268, %v268
          %vm272 = vcmask 261120
          %v274 = vsel %vm272, %v269, 0
          %v277 = vsel %vm272, %v270, 0
          %v280 = vsel %vm272, %v271, 0
          %282 = vmatpush.bf16.msra.mxu0 0
          %283 = vmatpush.bf16.msra.mxu0 0
          %284 = vmatpush.bf16.msra.mxu0 0
          %285 = vmatpush.bf16.msra.mxu0 0
          %286 = vmatpush.bf16.msra.mxu0 0
          %287 = vmatpush.bf16.msra.mxu0 0
          %288 = vmatpush.bf16.msra.mxu0 %v222
          %289 = vmatpush.bf16.msra.mxu0 %v220
          %290 = vmatmul.bf16.gmra.mxu0 %v274
          %v291 = vpop.f32.mrf.mxu0
          %v292 = vadd.f32 %v237, %v291
          %v293 = vpop.f32.mrf.mxu0
          %v294 = vadd.f32 %v242, %v293
          %295 = vmatmul.bf16.gmra.mxu0 %v277
          %v296 = vpop.f32.mrf.mxu0
          %v297 = vadd.f32 %v247, %v296
          %v298 = vpop.f32.mrf.mxu0
          %v299 = vadd.f32 %v252, %v298
          %300 = vmatmul.bf16.gmra.mxu0 %v280
          %v301 = vpop.f32.mrf.mxu0
          %v302 = vadd.f32 %v257, %v301
          %v303 = vpop.f32.mrf.mxu0
          %304 = vdwg.mxu0
          %305 = vmatpush.bf16.msra.mxu0 0
          %306 = vmatpush.bf16.msra.mxu0 0
          %307 = vmatpush.bf16.msra.mxu0 0
          %308 = vmatpush.bf16.msra.mxu0 0
          %309 = vmatpush.bf16.msra.mxu0 0
          %310 = vmatpush.bf16.msra.mxu0 0
          %311 = vmatpush.bf16.msra.mxu0 %v223
          %312 = vmatpush.bf16.msra.mxu0 %v221
          %313 = vmatmul.bf16.gmra.mxu0 %v274
          %v314 = vpop.f32.mrf.mxu0
          %v315 = vadd.f32 %v237, %v314
          %v316 = vpop.f32.mrf.mxu0
          %v317 = vadd.f32 %v242, %v316
          %318 = vmatmul.bf16.gmra.mxu0 %v277
          %v319 = vpop.f32.mrf.mxu0
          %v320 = vadd.f32 %v247, %v319
          %v321 = vpop.f32.mrf.mxu0
          %v322 = vadd.f32 %v252, %v321
          %323 = vmatmul.bf16.gmra.mxu0 %v280
          %v324 = vpop.f32.mrf.mxu0
          %v325 = vadd.f32 %v257, %v324
          %v326 = vpop.f32.mrf.mxu0
          %327 = vdwg.mxu0
          %v328 = vpack.c.bf16 %v315, %v292
          %v330 = vrot.slane %v328, 2
          %vm331 = vcmask 1041408
          %v334 = vsel %vm331, %v328, %v330
          %336 = vst [vmem:[#allocation2] sm:$0xf] %v334
          %337 = vst.sshfl [vmem:[#allocation1] sm:$0xff pattern:$0x75643120] %v328
          %s338 = scalar_lea.vmem [#allocation1], 1
          %v339 = vld [vmem:[%s338] ss:$2 sm:$0xff]
          %341 = vst [vmem:[#allocation3] sm:$0xf] %v339
          %v342 = vpack.c.bf16 %v317, %v294
          %v343 = vpack.c.bf16 %v320, %v297
          %v344 = vpack.c.bf16 %v322, %v299
          %v345 = vpack.c.bf16 %v325, %v302
          %346 = vst [vmem:[#allocation4] sm:$0xff] %v342
          %347 = vst [vmem:[#allocation4 + $0x8] sm:$0xff] %v343
          %348 = vst [vmem:[#allocation4 + $0x10] sm:$0xff] %v344
          %349 = vst [vmem:[#allocation4 + $0x18] sm:$0xff] %v345
        $region40: #{self_attention_pallas.1} parent=35 // pred_fallthru
          _
        %s350 = smul.u32 %s21, 128
        %s351 = sshra.s32 %s350, 7
        %s352 = sand.u32 %s350, 127
        %s353 = smul.addr %s351, 2
        %s354 = scalar_lea.vmem [#allocation3], %s353
        %v355 = vld [vmem:[%s354] sm:$0x3]
        %v356 = vld [vmem:[#allocation2] sm:$0xf]
        %358 = vst [vmem:[#allocation1] ss:$4 sm:$0xff] %v356
        %v359 = vld.sshfl [vmem:[#allocation1] sm:$0xff pattern:$0x73625140]
        %v360 = vld.sshfl [vmem:[#allocation1 + $0x8] sm:$0xff pattern:$0x73625140]
        %363 = vxpose.binary.xlu0.c.b16.start [1/16] %v360, %v359, 128
        %364 = vxpose.binary.xlu0.c.b16.cont [2/16] 0, 0, 128
        %365 = vxpose.binary.xlu0.c.b16.cont [3/16] 0, 0, 128
        %366 = vxpose.binary.xlu0.c.b16.cont [4/16] 0, 0, 128
        %367 = vxpose.binary.xlu0.c.b16.cont [5/16] 0, 0, 128
        %368 = vxpose.binary.xlu0.c.b16.cont [6/16] 0, 0, 128
        %369 = vxpose.binary.xlu0.c.b16.cont [7/16] 0, 0, 128
        %370 = vxpose.binary.xlu0.c.b16.end [8/16] 0, 0, 128
        %v371 = vpop.trf.xlu0
        %v372 = vpop.trf.xlu0
        %v373 = vpop.trf.xlu0
        %v374 = vpop.trf.xlu0
        %v375 = vpop.trf.xlu0
        %v376 = vpop.trf.xlu0
        %v377 = vpop.trf.xlu0
        %v378 = vpop.trf.xlu0
        %v379 = vpop.trf.xlu0
        %v380 = vpop.trf.xlu0
        %v381 = vpop.trf.xlu0
        %v382 = vpop.trf.xlu0
        %v383 = vpop.trf.xlu0
        %v384 = vpop.trf.xlu0
        %v385 = vpop.trf.xlu0
        %v386 = vpop.trf.xlu0
        %vm387 = vcmask 31744
        %v389 = vsel %vm387, %v371, 0
        %v392 = vsel %vm387, %v373, 0
        %v395 = vsel %vm387, %v375, 0
        %v398 = vsel %vm387, %v377, 0
        %v401 = vsel %vm387, %v379, 0
        %v404 = vsel %vm387, %v381, 0
        %v407 = vsel %vm387, %v383, 0
        %v410 = vsel %vm387, %v385, 0
        %v413 = vsel %vm387, %v372, 0
        %v416 = vsel %vm387, %v374, 0
        %v419 = vsel %vm387, %v376, 0
        %v422 = vsel %vm387, %v378, 0
        %v425 = vsel %vm387, %v380, 0
        %v428 = vsel %vm387, %v382, 0
        %v431 = vsel %vm387, %v384, 0
        %v434 = vsel %vm387, %v386, 0
        %vm436 = vcmask 1041408
        %v438 = vsel %vm436, %v355, 0
        %440 = vmatpush.bf16.msra.mxu0 0
        %441 = vmatpush.bf16.msra.mxu0 0
        %442 = vmatpush.bf16.msra.mxu0 0
        %443 = vmatpush.bf16.msra.mxu0 0
        %444 = vmatpush.bf16.msra.mxu0 0
        %445 = vmatpush.bf16.msra.mxu0 0
        %446 = vmatpush.bf16.msra.mxu0 0
        %447 = vmatpush.bf16.msra.mxu0 %v438
        %448 = vmatmul.bf16.gmra.mxu0 %v389
        %v449 = vpop.f32.mrf.mxu0
        %v450 = vadd.f32 0.0, %v449
        %v451 = vpop.f32.mrf.mxu0
        %v452 = vadd.f32 0.0, %v451
        %453 = vmatmul.bf16.gmra.mxu0 %v392
        %v454 = vpop.f32.mrf.mxu0
        %v455 = vadd.f32 0.0, %v454
        %v456 = vpop.f32.mrf.mxu0
        %v457 = vadd.f32 0.0, %v456
        %458 = vmatmul.bf16.gmra.mxu0 %v395
        %v459 = vpop.f32.mrf.mxu0
        %v460 = vadd.f32 0.0, %v459
        %v461 = vpop.f32.mrf.mxu0
        %v462 = vadd.f32 0.0, %v461
        %463 = vmatmul.bf16.gmra.mxu0 %v398
        %v464 = vpop.f32.mrf.mxu0
        %v465 = vadd.f32 0.0, %v464
        %v466 = vpop.f32.mrf.mxu0
        %v467 = vadd.f32 0.0, %v466
        %468 = vmatmul.bf16.gmra.mxu0 %v401
        %v469 = vpop.f32.mrf.mxu0
        %v470 = vadd.f32 0.0, %v469
        %v471 = vpop.f32.mrf.mxu0
        %v472 = vadd.f32 0.0, %v471
        %473 = vmatmul.bf16.gmra.mxu0 %v404
        %v474 = vpop.f32.mrf.mxu0
        %v475 = vadd.f32 0.0, %v474
        %v476 = vpop.f32.mrf.mxu0
        %v477 = vadd.f32 0.0, %v476
        %478 = vmatmul.bf16.gmra.mxu0 %v407
        %v479 = vpop.f32.mrf.mxu0
        %v480 = vadd.f32 0.0, %v479
        %v481 = vpop.f32.mrf.mxu0
        %v482 = vadd.f32 0.0, %v481
        %483 = vmatmul.bf16.gmra.mxu0 %v410
        %v484 = vpop.f32.mrf.mxu0
        %v485 = vadd.f32 0.0, %v484
        %v486 = vpop.f32.mrf.mxu0
        %v487 = vadd.f32 0.0, %v486
        %488 = vmatmul.bf16.gmra.mxu0 %v413
        %v489 = vpop.f32.mrf.mxu0
        %v490 = vadd.f32 0.0, %v489
        %v491 = vpop.f32.mrf.mxu0
        %v492 = vadd.f32 0.0, %v491
        %493 = vmatmul.bf16.gmra.mxu0 %v416
        %v494 = vpop.f32.mrf.mxu0
        %v495 = vadd.f32 0.0, %v494
        %v496 = vpop.f32.mrf.mxu0
        %v497 = vadd.f32 0.0, %v496
        %498 = vmatmul.bf16.gmra.mxu0 %v419
        %v499 = vpop.f32.mrf.mxu0
        %v500 = vadd.f32 0.0, %v499
        %v501 = vpop.f32.mrf.mxu0
        %v502 = vadd.f32 0.0, %v501
        %503 = vmatmul.bf16.gmra.mxu0 %v422
        %v504 = vpop.f32.mrf.mxu0
        %v505 = vadd.f32 0.0, %v504
        %v506 = vpop.f32.mrf.mxu0
        %v507 = vadd.f32 0.0, %v506
        %508 = vmatmul.bf16.gmra.mxu0 %v425
        %v509 = vpop.f32.mrf.mxu0
        %v510 = vadd.f32 0.0, %v509
        %v511 = vpop.f32.mrf.mxu0
        %v512 = vadd.f32 0.0, %v511
        %513 = vmatmul.bf16.gmra.mxu0 %v428
        %v514 = vpop.f32.mrf.mxu0
        %v515 = vadd.f32 0.0, %v514
        %v516 = vpop.f32.mrf.mxu0
        %v517 = vadd.f32 0.0, %v516
        %518 = vmatmul.bf16.gmra.mxu0 %v431
        %v519 = vpop.f32.mrf.mxu0
        %v520 = vadd.f32 0.0, %v519
        %v521 = vpop.f32.mrf.mxu0
        %v522 = vadd.f32 0.0, %v521
        %523 = vmatmul.bf16.gmra.mxu0 %v434
        %v524 = vpop.f32.mrf.mxu0
        %v525 = vadd.f32 0.0, %v524
        %v526 = vpop.f32.mrf.mxu0
        %v527 = vadd.f32 0.0, %v526
        %528 = vdwg.mxu0
        %v529 = vmax.f32 %v450, %v460
        %v530 = vmax.f32 %v452, %v462
        %v531 = vmax.f32 %v455, %v465
        %v532 = vmax.f32 %v457, %v467
        %v533 = vmax.f32 %v529, %v470
        %v534 = vmax.f32 %v530, %v472
        %v535 = vmax.f32 %v531, %v475
        %v536 = vmax.f32 %v532, %v477
        %v537 = vmax.f32 %v533, %v480
        %v538 = vmax.f32 %v534, %v482
        %v539 = vmax.f32 %v535, %v485
        %v540 = vmax.f32 %v536, %v487
        %v541 = vmax.f32 %v537, %v490
        %v542 = vmax.f32 %v538, %v492
        %v543 = vmax.f32 %v539, %v495
        %v544 = vmax.f32 %v540, %v497
        %v545 = vmax.f32 %v541, %v500
        %v546 = vmax.f32 %v542, %v502
        %v547 = vmax.f32 %v543, %v505
        %v548 = vmax.f32 %v544, %v507
        %v549 = vmax.f32 %v545, %v510
        %v550 = vmax.f32 %v546, %v512
        %v551 = vmax.f32 %v547, %v515
        %v552 = vmax.f32 %v548, %v517
        %v553 = vmax.f32 %v549, %v520
        %v554 = vmax.f32 %v550, %v522
        %v555 = vmax.f32 %v551, %v525
        %v556 = vmax.f32 %v552, %v527
        %v557 = vmax.f32 %v553, %v554
        %v558 = vmax.f32 %v555, %v556
        %v559 = vmax.f32 %v557, %v558
        %v560 = vrot.slane %v559, 4
        %v561 = vmax.f32 %v559, %v560
        %v562 = vrot.slane %v561, 2
        %v563 = vmax.f32 %v561, %v562
        %v564 = vrot.slane %v563, 1
        %v565 = vmax.f32 %v563, %v564
        %v566 = vsub.f32 %v450, %v565
        %v567 = vsub.f32 %v452, %v565
        %v568 = vsub.f32 %v455, %v565
        %v569 = vsub.f32 %v457, %v565
        %v570 = vsub.f32 %v460, %v565
        %v571 = vsub.f32 %v462, %v565
        %v572 = vsub.f32 %v465, %v565
        %v573 = vsub.f32 %v467, %v565
        %v574 = vsub.f32 %v470, %v565
        %v575 = vsub.f32 %v472, %v565
        %v576 = vsub.f32 %v475, %v565
        %v577 = vsub.f32 %v477, %v565
        %v578 = vsub.f32 %v480, %v565
        %v579 = vsub.f32 %v482, %v565
        %v580 = vsub.f32 %v485, %v565
        %v581 = vsub.f32 %v487, %v565
        %v582 = vsub.f32 %v490, %v565
        %v583 = vsub.f32 %v492, %v565
        %v584 = vsub.f32 %v495, %v565
        %v585 = vsub.f32 %v497, %v565
        %v586 = vsub.f32 %v500, %v565
        %v587 = vsub.f32 %v502, %v565
        %v588 = vsub.f32 %v505, %v565
        %v589 = vsub.f32 %v507, %v565
        %v590 = vsub.f32 %v510, %v565
        %v591 = vsub.f32 %v512, %v565
        %v592 = vsub.f32 %v515, %v565
        %v593 = vsub.f32 %v517, %v565
        %v594 = vsub.f32 %v520, %v565
        %v595 = vsub.f32 %v522, %v565
        %v596 = vsub.f32 %v525, %v565
        %v597 = vsub.f32 %v527, %v565
        %v598 = vmul.f32 %v566, 1.442695
        %v599 = vpow.pop %v598
        %v600 = vmul.f32 %v567, 1.442695
        %v601 = vpow.pop %v600
        %v602 = vmul.f32 %v568, 1.442695
        %v603 = vpow.pop %v602
        %v604 = vmul.f32 %v569, 1.442695
        %v605 = vpow.pop %v604
        %v606 = vmul.f32 %v570, 1.442695
        %v607 = vpow.pop %v606
        %v608 = vmul.f32 %v571, 1.442695
        %v609 = vpow.pop %v608
        %v610 = vmul.f32 %v572, 1.442695
        %v611 = vpow.pop %v610
        %v612 = vmul.f32 %v573, 1.442695
        %v613 = vpow.pop %v612
        %v614 = vmul.f32 %v574, 1.442695
        %v615 = vpow.pop %v614
        %v616 = vmul.f32 %v575, 1.442695
        %v617 = vpow.pop %v616
        %v618 = vmul.f32 %v576, 1.442695
        %v619 = vpow.pop %v618
        %v620 = vmul.f32 %v577, 1.442695
        %v621 = vpow.pop %v620
        %v622 = vmul.f32 %v578, 1.442695
        %v623 = vpow.pop %v622
        %v624 = vmul.f32 %v579, 1.442695
        %v625 = vpow.pop %v624
        %v626 = vmul.f32 %v580, 1.442695
        %v627 = vpow.pop %v626
        %v628 = vmul.f32 %v581, 1.442695
        %v629 = vpow.pop %v628
        %v630 = vmul.f32 %v582, 1.442695
        %v631 = vpow.pop %v630
        %v632 = vmul.f32 %v583, 1.442695
        %v633 = vpow.pop %v632
        %v634 = vmul.f32 %v584, 1.442695
        %v635 = vpow.pop %v634
        %v636 = vmul.f32 %v585, 1.442695
        %v637 = vpow.pop %v636
        %v638 = vmul.f32 %v586, 1.442695
        %v639 = vpow.pop %v638
        %v640 = vmul.f32 %v587, 1.442695
        %v641 = vpow.pop %v640
        %v642 = vmul.f32 %v588, 1.442695
        %v643 = vpow.pop %v642
        %v644 = vmul.f32 %v589, 1.442695
        %v645 = vpow.pop %v644
        %v646 = vmul.f32 %v590, 1.442695
        %v647 = vpow.pop %v646
        %v648 = vmul.f32 %v591, 1.442695
        %v649 = vpow.pop %v648
        %v650 = vmul.f32 %v592, 1.442695
        %v651 = vpow.pop %v650
        %v652 = vmul.f32 %v593, 1.442695
        %v653 = vpow.pop %v652
        %v654 = vmul.f32 %v594, 1.442695
        %v655 = vpow.pop %v654
        %v656 = vmul.f32 %v595, 1.442695
        %v657 = vpow.pop %v656
        %v658 = vmul.f32 %v596, 1.442695
        %v659 = vpow.pop %v658
        %v660 = vmul.f32 %v597, 1.442695
        %v661 = vpow.pop %v660
        %v662 = vadd.f32 %v599, %v601
        %v663 = vadd.f32 %v662, %v603
        %v664 = vadd.f32 %v663, %v605
        %v665 = vadd.f32 %v664, %v607
        %v666 = vadd.f32 %v665, %v609
        %v667 = vadd.f32 %v666, %v611
        %v668 = vadd.f32 %v667, %v613
        %v669 = vadd.f32 %v668, %v615
        %v670 = vadd.f32 %v669, %v617
        %v671 = vadd.f32 %v670, %v619
        %v672 = vadd.f32 %v671, %v621
        %v673 = vadd.f32 %v672, %v623
        %v674 = vadd.f32 %v673, %v625
        %v675 = vadd.f32 %v674, %v627
        %v676 = vadd.f32 %v675, %v629
        %v677 = vadd.f32 %v676, %v631
        %v678 = vadd.f32 %v677, %v633
        %v679 = vadd.f32 %v678, %v635
        %v680 = vadd.f32 %v679, %v637
        %v681 = vadd.f32 %v680, %v639
        %v682 = vadd.f32 %v681, %v641
        %v683 = vadd.f32 %v682, %v643
        %v684 = vadd.f32 %v683, %v645
        %v685 = vadd.f32 %v684, %v647
        %v686 = vadd.f32 %v685, %v649
        %v687 = vadd.f32 %v686, %v651
        %v688 = vadd.f32 %v687, %v653
        %v689 = vadd.f32 %v688, %v655
        %v690 = vadd.f32 %v689, %v657
        %v691 = vadd.f32 %v690, %v659
        %v692 = vadd.f32 %v691, %v661
        %v693 = vrot.slane %v692, 4
        %v694 = vadd.f32 %v692, %v693
        %v695 = vrot.slane %v694, 2
        %v696 = vadd.f32 %v694, %v695
        %v697 = vrot.slane %v696, 1
        %v698 = vadd.f32 %v696, %v697
        %v699 = vld [vmem:[#allocation4] sm:$0xff]
        %v700 = vld [vmem:[#allocation4 + $0x8] sm:$0xff]
        %v701 = vld [vmem:[#allocation4 + $0x10] sm:$0xff]
        %v702 = vld [vmem:[#allocation4 + $0x18] sm:$0xff]
        %v703 = vpack.c.bf16 %v601, %v599
        %v704 = vpack.c.bf16 %v605, %v603
        %v705 = vpack.c.bf16 %v609, %v607
        %v706 = vpack.c.bf16 %v613, %v611
        %v707 = vpack.c.bf16 %v617, %v615
        %v708 = vpack.c.bf16 %v621, %v619
        %v709 = vpack.c.bf16 %v625, %v623
        %v710 = vpack.c.bf16 %v629, %v627
        %v711 = vpack.c.bf16 %v633, %v631
        %v712 = vpack.c.bf16 %v637, %v635
        %v713 = vpack.c.bf16 %v641, %v639
        %v714 = vpack.c.bf16 %v645, %v643
        %v715 = vpack.c.bf16 %v649, %v647
        %v716 = vpack.c.bf16 %v653, %v651
        %v717 = vpack.c.bf16 %v657, %v655
        %v718 = vpack.c.bf16 %v661, %v659
        %v723 = vunpack.c.l.b16 %v699
        %v724 = vunpack.c.h.b16 %v699
        %v725 = vunpack.c.l.b16 %v700
        %v726 = vunpack.c.h.b16 %v700
        %v727 = vunpack.c.l.b16 %v701
        %v728 = vunpack.c.h.b16 %v701
        %v729 = vunpack.c.l.b16 %v702
        %v730 = vunpack.c.h.b16 %v702
        %v731 = vpack.c.b16 %v725, %v723
        %v732 = vpack.c.b16 %v726, %v724
        %v733 = vpack.c.b16 %v729, %v727
        %v734 = vpack.c.b16 %v730, %v728
        %739 = vmatpush.bf16.msra.mxu0 %v710
        %740 = vmatpush.bf16.msra.mxu0 %v709
        %741 = vmatpush.bf16.msra.mxu0 %v708
        %742 = vmatpush.bf16.msra.mxu0 %v707
        %743 = vmatpush.bf16.msra.mxu0 %v706
        %744 = vmatpush.bf16.msra.mxu0 %v705
        %745 = vmatpush.bf16.msra.mxu0 %v704
        %746 = vmatpush.bf16.msra.mxu0 %v703
        %747 = vmatmul.bf16.gmra.mxu0 %v731
        %v748 = vpop.f32.mrf.mxu0
        %v749 = vadd.f32 0.0, %v748
        %v750 = vpop.f32.mrf.mxu0
        %v751 = vadd.f32 0.0, %v750
        %752 = vmatmul.bf16.gmra.mxu0 %v733
        %v753 = vpop.f32.mrf.mxu0
        %v754 = vadd.f32 0.0, %v753
        %v755 = vpop.f32.mrf.mxu0
        %v756 = vadd.f32 0.0, %v755
        %757 = vdwg.mxu0
        %758 = vmatpush.bf16.msra.mxu0 %v718
        %759 = vmatpush.bf16.msra.mxu0 %v717
        %760 = vmatpush.bf16.msra.mxu0 %v716
        %761 = vmatpush.bf16.msra.mxu0 %v715
        %762 = vmatpush.bf16.msra.mxu0 %v714
        %763 = vmatpush.bf16.msra.mxu0 %v713
        %764 = vmatpush.bf16.msra.mxu0 %v712
        %765 = vmatpush.bf16.msra.mxu0 %v711
        %766 = vmatmul.bf16.gmra.mxu0 %v732
        %v767 = vpop.f32.mrf.mxu0
        %v768 = vadd.f32 %v749, %v767
        %v769 = vpop.f32.mrf.mxu0
        %v770 = vadd.f32 %v751, %v769
        %771 = vmatmul.bf16.gmra.mxu0 %v734
        %v772 = vpop.f32.mrf.mxu0
        %v773 = vadd.f32 %v754, %v772
        %v774 = vpop.f32.mrf.mxu0
        %v775 = vadd.f32 %v756, %v774
        %776 = vdwg.mxu0
        %s777 = sld [smem:[#allocation5]]
        %v778 = vrcp.pop %v698
        %v779 = vstv %s777
        %v780 = vmul.f32 %v779, %v778
        %s781 = smul.addr %s351, 8
        %s782 = scalar_lea.vmem %s206, %s781
        %v783 = vld [vmem:[%s782] sm:$0xff]
        %v784 = vld [vmem:[%s782 + $0x10] sm:$0xff]
        %v785 = vld [vmem:[%s782 + $0x20] sm:$0xff]
        %v786 = vld [vmem:[%s782 + $0x30] sm:$0xff]
        %v787 = vmul.f32 %v768, %v780
        %v788 = vmul.f32 %v770, %v780
        %v789 = vmul.f32 %v773, %v780
        %v790 = vmul.f32 %v775, %v780
        %v791 = vadd.f32 %v783, %v787
        %v792 = vadd.f32 %v784, %v788
        %v793 = vadd.f32 %v785, %v789
        %v794 = vadd.f32 %v786, %v790
        %795 = vst [vmem:[%s201] sm:$0xff] %v791
        %796 = vst [vmem:[%s201 + $0x8] sm:$0xff] %v792
        %797 = vst [vmem:[%s201 + $0x10] sm:$0xff] %v793
        %798 = vst [vmem:[%s201 + $0x18] sm:$0xff] %v794
        %s799 = sand.u32 %s127, 1
        %s800 = sand.u32 %s127, 1
        %s801 = smul.addr %s800, 32
        %s802 = scalar_lea.vmem [#allocation6], %s801
        // Predicated region
        $region41: #{self_attention_pallas.1} parent=35 // pred_check
          %p803 = pneg %p137
        $region42: #{self_attention_pallas.1} parent=35 // pred_check_branch
          %805 = sbr.rel (%p803) target = $region44
        $region43: #{self_attention_pallas.1} parent=35 // pred_region
          %s806 = smul.addr %s20, 8
          %s807 = sadd.s32 %s21, %s806
          %s808 = smul.addr %s807, 8
          %s809 = scalar_lea.vmem %s4, %s808
          // Predicated region
          $region45: #{self_attention_pallas.1} parent=43 // pred_check
            _
          $region46: #{self_attention_pallas.1} parent=43 // pred_check_branch
            %811 = sbr.rel (0) target = $region48
          $region47: #{self_attention_pallas.1} parent=43 // pred_region
            // Predicated region
            $region49: #{self_attention_pallas.1} parent=47 // pred_check
              _
            $region50: #{self_attention_pallas.1} parent=47 // pred_check_branch
              %813 = sbr.rel (0) target = $region52
            $region51: #{self_attention_pallas.1} parent=47 // pred_region
              // Predicated region
              $region64: #{self_attention_pallas.1} parent=51 // pred_check
                _
              $region65: #{self_attention_pallas.1} parent=51 // pred_check_branch
                %835 = sbr.rel (0) target = $region67
              $region66: #{self_attention_pallas.1} parent=51 // pred_region
                loop: start=0, step=1, limit=1
                $region68: #{self_attention_pallas.1} parent=66 // loop_pre_header
                  _
                $region69: #{self_attention_pallas.1} parent=66 // loop_header
                  %s837 = sphi 0, %s841
                  %p838 = scmp.ge.s32.totalorder %s837, 1
                  %s842 = sphi %s802, %s802
                  %s843 = sphi %s809, %s809
                $region70: #{self_attention_pallas.1} parent=66 // loop_header_branch
                  %840 = sbr.rel (%p838) target = $region74
                $region71: #{self_attention_pallas.1} parent=66 // loop_body
                  %v844 = vld [vmem:[%s842] sm:$0xff]
                  %845 = vst [vmem:[%s843] sm:$0xff] %v844
                  %v846 = vld [vmem:[%s842 + $0x8] sm:$0xff]
                  %847 = vst [vmem:[%s843 + $0x10] sm:$0xff] %v846
                  %v848 = vld [vmem:[%s842 + $0x10] sm:$0xff]
                  %849 = vst [vmem:[%s843 + $0x20] sm:$0xff] %v848
                  %v850 = vld [vmem:[%s842 + $0x18] sm:$0xff]
                  %851 = vst [vmem:[%s843 + $0x30] sm:$0xff] %v850
                $region72: #{self_attention_pallas.1} parent=66 // loop_footer
                  %s841 = sadd.s32 1, %s837
                $region73: #{self_attention_pallas.1} parent=66 // loop_footer_branch
                  %836 = sbr.rel target = $region69
                $region74: #{self_attention_pallas.1} parent=66 // loop_exit
                  _
              $region67: #{self_attention_pallas.1} parent=51 // pred_fallthru
                _
              // Predicated region
              $region75: #{self_attention_pallas.1} parent=51 // pred_check
                _
              $region76: #{self_attention_pallas.1} parent=51 // pred_check_branch
                %853 = sbr.rel target = $region78
              $region77: #{self_attention_pallas.1} parent=51 // pred_region
                _
              $region78: #{self_attention_pallas.1} parent=51 // pred_fallthru
                _
            $region52: #{self_attention_pallas.1} parent=47 // pred_fallthru
              _
            // Predicated region
            $region53: #{self_attention_pallas.1} parent=47 // pred_check
              _
            $region54: #{self_attention_pallas.1} parent=47 // pred_check_branch
              %815 = sbr.rel target = $region56
            $region55: #{self_attention_pallas.1} parent=47 // pred_region
              %s817 = ssub.s32 256, 1
              loop: start=0, step=1, limit=1
              $region57: #{self_attention_pallas.1} parent=55 // loop_pre_header
                _
              $region58: #{self_attention_pallas.1} parent=55 // loop_header
                %s819 = sphi 0, %s823
                %p820 = scmp.ge.s32.totalorder %s819, 1
                %s824 = sphi %s802, %s802
                %s825 = sphi %s809, %s809
              $region59: #{self_attention_pallas.1} parent=55 // loop_header_branch
                %822 = sbr.rel (%p820) target = $region63
              $region60: #{self_attention_pallas.1} parent=55 // loop_body
                %v826 = vld [vmem:[%s824] sm:%s817]
                %827 = vst [vmem:[%s825] sm:%s817] %v826
                %v828 = vld [vmem:[%s824 + $0x8] sm:%s817]
                %829 = vst [vmem:[%s825 + $0x10] sm:%s817] %v828
                %v830 = vld [vmem:[%s824 + $0x10] sm:%s817]
                %831 = vst [vmem:[%s825 + $0x20] sm:%s817] %v830
                %v832 = vld [vmem:[%s824 + $0x18] sm:%s817]
                %833 = vst [vmem:[%s825 + $0x30] sm:%s817] %v832
              $region61: #{self_attention_pallas.1} parent=55 // loop_footer
                %s823 = sadd.s32 1, %s819
              $region62: #{self_attention_pallas.1} parent=55 // loop_footer_branch
                %818 = sbr.rel target = $region58
              $region63: #{self_attention_pallas.1} parent=55 // loop_exit
                _
            $region56: #{self_attention_pallas.1} parent=47 // pred_fallthru
              _
          $region48: #{self_attention_pallas.1} parent=43 // pred_fallthru
            _
          %854 = vnop
        $region44: #{self_attention_pallas.1} parent=35 // pred_fallthru
          _
      $region36: #{self_attention_pallas.1} parent=5 // pred_fallthru
        _
      %p855 = scmp.le.s32.totalorder 2, %s11
      // Predicated region
      $region79: #{self_attention_pallas.1} parent=5 // pred_check
        %p856 = pneg %p855
      $region80: #{self_attention_pallas.1} parent=5 // pred_check_branch
        %858 = sbr.rel (%p856) target = $region82
      $region81: #{self_attention_pallas.1} parent=5 // pred_region
        %s859 = ssub.s32 %s11, 2
        // Predicated region
        $region83: #{self_attention_pallas.1} parent=81 // pred_check
          %p860 = pneg %p143
        $region84: #{self_attention_pallas.1} parent=81 // pred_check_branch
          %862 = sbr.rel (%p860) target = $region86
        $region85: #{self_attention_pallas.1} parent=81 // pred_region
          %s863 = sand.u32 %s128, 1
          %s864 = sand.u32 %s128, 1
          %s865 = smul.addr %s864, 32
          %s866 = scalar_lea.vmem [#allocation6], %s865
        $region86: #{self_attention_pallas.1} parent=81 // pred_fallthru
          _
      $region82: #{self_attention_pallas.1} parent=5 // pred_fallthru
        _
    $region6: #{self_attention_pallas.1} parent=1 // loop_footer
      %s15 = sadd.s32 1, %s11
    $region7: #{self_attention_pallas.1} parent=1 // loop_footer_branch
      %10 = sbr.rel target = $region3
    $region8: #{self_attention_pallas.1} parent=1 // loop_exit
      _

</llo_original>
